<compile_context>
chip_gen: v7x
topology: tpu7x:2x2x1
jax: 0.10.0
libtpu: 0.0.40
codegen_flags: <defaults>
</compile_context>

<pallas_src>
from typing import NamedTuple

import jax
import jax.numpy as jnp
from jax.experimental import pallas as pl
from jax.experimental.pallas import tpu as pltpu

_MiB = 1024 * 1024


def _round_up(x, m):
    return ((x + m - 1) // m) * m


def _choose_tile(padded, target, quantum):
    """Pick a tile (multiple of `quantum`, <= target) for an already-aligned dim.

    Prefers tiles that divide `padded` exactly (zero extra padding); only rounds
    `padded` up to a multiple of `target` when divisors would be tiny and the
    round-up waste is small.  Returns (tile, new_padded)."""
    assert padded % quantum == 0 and target % quantum == 0
    if padded <= target:
        return padded, padded
    best = None
    d = target
    while d >= quantum:
        if padded % d == 0:
            best = d
            break
        d -= quantum
    if best is not None and best * 2 > target:       # zero waste, near-target tile
        return best, padded
    pad_ru = _round_up(padded, target)
    if (pad_ru - padded) * 8 <= padded:               # <= 12.5% round-up waste
        return target, pad_ru
    if best is not None and best * 8 >= target:       # zero waste, tile >= target/8
        return best, padded
    return target, pad_ru


class _Plan(NamedTuple):
    B: int
    F: int
    hidden: int
    tb: int
    tk: int
    b_pad: int
    f_pad: int
    w1_resident: bool
    vmem_limit: int


def plan_lnn_v2(batch, input_size, hidden=128, *, tb_target=512, tk_target=2048):
    """Static tiling plan (per model/batch-size, not per call)."""
    assert hidden % 128 == 0, "hidden must be a multiple of 128 (lane-aligned)"
    assert tb_target % 8 == 0 and tk_target % 128 == 0

    b_pad0 = _round_up(max(int(batch), 1), 8)
    f_pad0 = _round_up(int(input_size), 128)

    try:
        vmem_cap = int(pltpu.get_tpu_info().vmem_capacity_bytes)
    except Exception:
        vmem_cap = 64 * _MiB                      # conservative: v7x per-TC VMEM
    # Budget for one grid step's pipelined footprint (double-buffered inputs).
    budget = max(16 * _MiB, min(vmem_cap // 2 - 8 * _MiB, 56 * _MiB))

    # --- K (feature) tiling -------------------------------------------------
    tk_t = tk_target
    while True:
        tk, f_pad = _choose_tile(f_pad0, tk_t, 128)
        if 2 * tb_target * tk * 4 <= (2 * budget) // 3 or tk_t <= 128:
            break
        tk_t = max(128, _round_up(tk_t // 2, 128))

    # Keep w1 fully resident in VMEM (DMA'd once) when it comfortably fits.
    w1_bytes = f_pad * hidden * 2                  # bf16
    w1_resident = 2 * w1_bytes <= min(12 * _MiB, budget // 3)
    w1_buf = 2 * w1_bytes if w1_resident else 2 * tk * hidden * 2

    # --- batch tiling ---------------------------------------------------------
    small = 4 * (2 * hidden * 4) + 64 * 1024       # b1/w2 buffers + slack
    tb_t = tb_target
    while True:
        tb, b_pad = _choose_tile(b_pad0, tb_t, 8)
        footprint = 2 * tb * tk * 4 + w1_buf + tb * hidden * 4 + small
        if footprint <= budget or tb_t <= 8:
            break
        tb_t = max(8, _round_up(tb_t // 2, 8))

    # v7x megacore: keep >= 2 tiles on the "parallel" batch axis when possible.
    if b_pad // tb == 1 and b_pad >= 16 and b_pad % 16 == 0:
        tb = b_pad // 2
        footprint = 2 * tb * tk * 4 + w1_buf + tb * hidden * 4 + small
    # TODO(synk): for tiny-batch inference (b_pad < 16, single batch tile) one
    # v7x TensorCore idles; a core_map K-split with per-core partial
    # accumulators + combine would recover it.

    vmem_limit = int(min(max(footprint + 8 * _MiB, 32 * _MiB),
                         max(vmem_cap - 8 * _MiB, 32 * _MiB)))
    return _Plan(int(batch), int(input_size), int(hidden),
                 tb, tk, b_pad, f_pad, bool(w1_resident), vmem_limit)


def prepare_lnn_v2_params(w1, b1, w2, b2, plan):
    """Hoisted weight preprocessing (do once; weights are constant)."""
    F, hidden = w1.shape
    assert F == plan.F and hidden == plan.hidden
    w1_bf = w1.astype(jnp.bfloat16)
    if plan.f_pad != F:
        w1_bf = jnp.pad(w1_bf, ((0, plan.f_pad - F), (0, 0)))
    b1_2d = jnp.asarray(b1, jnp.float32).reshape(1, hidden)
    w2_row = jnp.asarray(w2, jnp.float32).reshape(1, hidden)
    b2_2d = jnp.asarray(b2, jnp.float32).reshape(1, 1)
    return w1_bf, b1_2d, w2_row, b2_2d


def _make_kernel(tk, w1_resident):
    def kernel(x_ref, w1_ref, b1_ref, w2_ref, b2_ref, o_ref, acc_ref):
        k = pl.program_id(1)

        @pl.when(k == 0)
        def _():
            acc_ref[...] = jnp.zeros_like(acc_ref)

        # Cast x in-kernel (VPU) -- no wrapper-side padded bf16 copy of x.
        x_bf = x_ref[...].astype(jnp.bfloat16)
        if w1_resident:
            off = pl.multiple_of(k * tk, 128)
            w1_tile = w1_ref[pl.ds(off, tk), :]     # slice the resident weight
        else:
            w1_tile = w1_ref[...]
        # First-layer partial product on the MXU: (tb,tk)bf16 @ (tk,H)bf16 -> f32.
        acc_ref[...] += jnp.dot(x_bf, w1_tile, preferred_element_type=jnp.float32)

        @pl.when(k == pl.num_programs(1) - 1)
        def _():
            h = jnp.maximum(acc_ref[...] + b1_ref[...], 0.0)            # (tb, H) f32
            # Second Linear (N=1): VPU multiply + lane reduction, keep MXU free.
            out = jnp.sum(h * w2_ref[...], axis=-1, keepdims=True)      # (tb, 1)
            o_ref[...] = (out + b2_ref[0, 0]).astype(o_ref.dtype)
            # TODO(synk): a lane-dense (1, tb) output layout would avoid masked
            # vst on this (tb, 1) column store; output bytes are negligible here.
    return kernel


def lnn_v2_forward(x, params, plan):
    """Forward pass of LNNmodelv2.

    x      : (B, C, H, W) float32 (NCHW, like the PyTorch module)
    params : output of prepare_lnn_v2_params()
    plan   : output of plan_lnn_v2()
    returns (B, 1) float32
    """
    w1_bf, b1_2d, w2_row, b2_2d = params
    B = x.shape[0]
    F = 1
    for d in x.shape[1:]:
        F *= d
    assert B == plan.B and F == plan.F
    hidden = plan.hidden

    x_flat = x.reshape(B, F).astype(jnp.float32)   # nn.Flatten() semantics
    if (plan.b_pad, plan.f_pad) != (B, F):         # alignment-only padding
        x_flat = jnp.pad(x_flat, ((0, plan.b_pad - B), (0, plan.f_pad - F)))

    grid = (plan.b_pad // plan.tb, plan.f_pad // plan.tk)

    if plan.w1_resident:
        w1_spec = pl.BlockSpec((plan.f_pad, hidden), lambda i, k: (0, 0))
        w1_hbm_reads = 1
    else:
        w1_spec = pl.BlockSpec((plan.tk, hidden), lambda i, k: (k, 0))
        w1_hbm_reads = grid[0]
    # TODO(synk): if a profile shows exposed DMA at the batch-tile boundary, add
    # pipeline_mode=pl.Buffered(3) on the x BlockSpec.

    cost = pl.CostEstimate(
        flops=2 * plan.b_pad * plan.f_pad * hidden + 4 * plan.b_pad * hidden,
        transcendentals=0,
        bytes_accessed=(plan.b_pad * plan.f_pad * 4           # x streamed once (f32)
                        + w1_bf.size * 2 * w1_hbm_reads       # w1 (bf16)
                        + (b1_2d.size + w2_row.size + b2_2d.size) * 4
                        + plan.b_pad * 4),
    )

    out = pl.pallas_call(
        _make_kernel(plan.tk, plan.w1_resident),
        out_shape=jax.ShapeDtypeStruct((plan.b_pad, 1), jnp.float32),
        grid=grid,
        in_specs=[
            pl.BlockSpec((plan.tb, plan.tk), lambda i, k: (i, k)),  # x (f32, streamed)
            w1_spec,                                                 # w1 (resident/streamed)
            pl.BlockSpec((1, hidden), lambda i, k: (0, 0)),          # b1 (resident)
            pl.BlockSpec((1, hidden), lambda i, k: (0, 0)),          # w2 row (resident)
            pl.BlockSpec(memory_space=pltpu.MemorySpace.SMEM),       # b2 scalar in SMEM
        ],
        out_specs=pl.BlockSpec((plan.tb, 1), lambda i, k: (i, 0)),
        scratch_shapes=[pltpu.VMEM((plan.tb, hidden), jnp.float32)],  # f32 accumulator
        compiler_params=pltpu.CompilerParams(
            dimension_semantics=("parallel", "arbitrary"),
            vmem_limit_bytes=plan.vmem_limit,
        ),
        cost_estimate=cost,
    )(x_flat, w1_bf, b1_2d, w2_row, b2_2d)

    return out[:B]


if __name__ == "__main__":
    key = jax.random.PRNGKey(0)
    k_x, k_w1, k_b1, k_w2, k_b2 = jax.random.split(key, 5)

    # Small shapes consistent with the module: batch=2, channels=4, spatial=16x16.
    B, C, H, W = 2, 4, 16, 16
    input_size = C * H * W          # 1024
    hidden_size = 128

    x = jax.random.normal(k_x, (B, C, H, W), dtype=jnp.float32)

    # Deterministic synthetic parameter init (PyTorch-Linear-like scale).
    # NOTE: w1 is (in_features, hidden) == transpose of PyTorch nn.Linear weight.
    s1 = 1.0 / jnp.sqrt(jnp.float32(input_size))
    s2 = 1.0 / jnp.sqrt(jnp.float32(hidden_size))
    w1 = jax.random.uniform(k_w1, (input_size, hidden_size), jnp.float32, -s1, s1)
    b1 = jax.random.uniform(k_b1, (1, hidden_size), jnp.float32, -s1, s1)
    w2 = jax.random.uniform(k_w2, (hidden_size, 1), jnp.float32, -s2, s2)
    b2 = jax.random.uniform(k_b2, (1, 1), jnp.float32, -s2, s2)

    plan = plan_lnn_v2(B, input_size, hidden_size)
    params = prepare_lnn_v2_params(w1, b1, w2, b2, plan)   # hoisted: once per model
    fwd = jax.jit(lambda xx: lnn_v2_forward(xx, params, plan))

    out = jax.block_until_ready(fwd(x))
    assert out.shape == (B, 1)

    # Reference using the same bf16 rounding of x/w1 the kernel applies (f32 math).
    xb = x.reshape(B, -1).astype(jnp.bfloat16).astype(jnp.float32)
    w1b = w1.astype(jnp.bfloat16).astype(jnp.float32)
    ref_bf = jnp.maximum(xb @ w1b + b1, 0.0) @ w2 + b2
    assert jnp.allclose(out, ref_bf, atol=2e-3, rtol=2e-3)

    # Sanity check vs the pure-f32 PyTorch-equivalent forward (looser tolerance).
    ref_f32 = jnp.maximum(x.reshape(B, -1) @ w1 + b1, 0.0) @ w2 + b2
    assert jnp.allclose(out, ref_f32, atol=2e-2, rtol=2e-2)

    print("KERNEL_OK")
</pallas_src>

<mosaic_0001>
module attributes {stable_mosaic.version = 11 : i64} {
  func.func @kernel(%arg0: i32, %arg1: i32, %arg2: memref<8x1024xf32, #tpu.memory_space<vmem>>, %arg3: memref<1024x128xbf16, #tpu.memory_space<vmem>>, %arg4: memref<1x128xf32, #tpu.memory_space<vmem>>, %arg5: memref<1x128xf32, #tpu.memory_space<vmem>>, %arg6: memref<1x1xf32, #tpu.memory_space<smem>>, %arg7: memref<8x1xf32, #tpu.memory_space<vmem>>, %arg8: memref<8x128xf32, #tpu.memory_space<vmem>>) attributes {dimension_semantics = [#tpu.dimension_semantics<parallel>, #tpu.dimension_semantics<arbitrary>], iteration_bounds = array<i64: 1, 1>, scalar_prefetch = 0 : i64, scratch_operands = 1 : i64, tpu.core_type = #tpu.core_type<tc>, window_params = [{transform_indices = @transform_0, window_bounds = array<i64: 8, 1024>}, {pipeline_mode = #tpu.pipeline_mode<synchronous>, transform_indices = @transform_1, window_bounds = array<i64: 1024, 128>}, {pipeline_mode = #tpu.pipeline_mode<synchronous>, transform_indices = @transform_2, window_bounds = array<i64: 1, 128>}, {pipeline_mode = #tpu.pipeline_mode<synchronous>, transform_indices = @transform_3, window_bounds = array<i64: 1, 128>}, {transform_indices = @transform_4, window_bounds = array<i64: 1, 1>}, {transform_indices = @transform_5, window_bounds = array<i64: 8, 1>}]} {
    %c0_i32 = arith.constant 0 : i32
    %0 = arith.cmpi eq, %arg1, %c0_i32 : i32
    %1 = arith.extui %0 : i1 to i32
    %c0_i32_0 = arith.constant 0 : i32
    %2 = arith.cmpi ne, %1, %c0_i32_0 : i32
    scf.if %2 {
      %cst_9 = arith.constant 0.000000e+00 : f32
      %16 = vector.broadcast %cst_9 : f32 to vector<8x128xf32>
      %c0_10 = arith.constant 0 : index
      %c0_11 = arith.constant 0 : index
      %17 = vector.load %arg8[%c0_10, %c0_11] : memref<8x128xf32, #tpu.memory_space<vmem>>, vector<8x128xf32>
      tpu.vector_store %arg8[%c0_10, %c0_11], %16 {strides = array<i32>} : memref<8x128xf32, #tpu.memory_space<vmem>>, vector<8x128xf32>,
    } else {
    }
    %c0 = arith.constant 0 : index
    %c0_1 = arith.constant 0 : index
    %3 = vector.load %arg2[%c0, %c0_1] : memref<8x1024xf32, #tpu.memory_space<vmem>>, vector<8x1024xf32>
    %4 = arith.truncf %3 : vector<8x1024xf32> to vector<8x1024xbf16>
    %c1024_i32 = arith.constant 1024 : i32
    %5 = arith.muli %arg1, %c1024_i32 : i32
    %6 = tpu.assume_multiple %5, 128 : i32
    %7 = arith.index_cast %6 : i32 to index
    %c0_2 = arith.constant 0 : index
    %8 = vector.load %arg3[%7, %c0_2] : memref<1024x128xbf16, #tpu.memory_space<vmem>>, vector<1024x128xbf16>
    %c0_3 = arith.constant 0 : index
    %c0_4 = arith.constant 0 : index
    %9 = vector.load %arg8[%c0_3, %c0_4] : memref<8x128xf32, #tpu.memory_space<vmem>>, vector<8x128xf32>
    %cst = arith.constant dense<0.000000e+00> : vector<8x128xf32>
    %10 = tpu.matmul %4, %8, %cst {dimension_numbers = #tpu.dot_dimension_numbers<[1], [0], [0], [1], [0, 0, 1, 1], [], []>} : vector<8x1024xbf16>, vector<1024x128xbf16>, vector<8x128xf32> -> vector<8x128xf32>
    %11 = arith.addf %9, %10 : vector<8x128xf32>
    %c0_5 = arith.constant 0 : index
    %c0_6 = arith.constant 0 : index
    %12 = vector.load %arg8[%c0_5, %c0_6] : memref<8x128xf32, #tpu.memory_space<vmem>>, vector<8x128xf32>
    tpu.vector_store %arg8[%c0_5, %c0_6], %11 {strides = array<i32>} : memref<8x128xf32, #tpu.memory_space<vmem>>, vector<8x128xf32>,
    %c0_i32_7 = arith.constant 0 : i32
    %13 = arith.cmpi eq, %arg1, %c0_i32_7 : i32
    %14 = arith.extui %13 : i1 to i32
    %c0_i32_8 = arith.constant 0 : i32
    %15 = arith.cmpi ne, %14, %c0_i32_8 : i32
    scf.if %15 {
      %c0_9 = arith.constant 0 : index
      %c0_10 = arith.constant 0 : index
      %16 = vector.load %arg8[%c0_9, %c0_10] : memref<8x128xf32, #tpu.memory_space<vmem>>, vector<8x128xf32>
      %c0_11 = arith.constant 0 : index
      %c0_12 = arith.constant 0 : index
      %17 = vector.load %arg4[%c0_11, %c0_12] : memref<1x128xf32, #tpu.memory_space<vmem>>, vector<1x128xf32>
      %18 = vector.broadcast %17 : vector<1x128xf32> to vector<8x128xf32>
      %19 = arith.addf %16, %18 : vector<8x128xf32>
      %cst_13 = arith.constant 0.000000e+00 : f32
      %20 = vector.broadcast %cst_13 : f32 to vector<8x128xf32>
      %21 = arith.maximumf %19, %20 : vector<8x128xf32>
      %c0_14 = arith.constant 0 : index
      %c0_15 = arith.constant 0 : index
      %22 = vector.load %arg5[%c0_14, %c0_15] : memref<1x128xf32, #tpu.memory_space<vmem>>, vector<1x128xf32>
      %23 = vector.broadcast %22 : vector<1x128xf32> to vector<8x128xf32>
      %24 = arith.mulf %21, %23 : vector<8x128xf32>
      %cst_16 = arith.constant dense<0.000000e+00> : vector<8xf32>
      %25 = vector.multi_reduction <add>, %24, %cst_16 [1] : vector<8x128xf32> to vector<8xf32>
      %26 = vector.shape_cast %25 : vector<8xf32> to vector<8x1xf32>
      %c0_17 = arith.constant 0 : index
      %c0_18 = arith.constant 0 : index
      %27 = memref.load %arg6[%c0_17, %c0_18] : memref<1x1xf32, #tpu.memory_space<smem>>
      %28 = vector.broadcast %27 : f32 to vector<8x1xf32>
      %29 = arith.addf %26, %28 : vector<8x1xf32>
      %c0_19 = arith.constant 0 : index
      %c0_20 = arith.constant 0 : index
      %30 = vector.load %arg7[%c0_19, %c0_20] : memref<8x1xf32, #tpu.memory_space<vmem>>, vector<8x1xf32>
      tpu.vector_store %arg7[%c0_19, %c0_20], %29 {strides = array<i32>} : memref<8x1xf32, #tpu.memory_space<vmem>>, vector<8x1xf32>,
    } else {
    }
    return
  }
  func.func @transform_0(%arg0: i32, %arg1: i32) -> (i32, i32) {
    %c0_i32 = arith.constant 0 : i32
    return %arg0, %arg1 : i32, i32
  }
  func.func @transform_1(%arg0: i32, %arg1: i32) -> (i32, i32) {
    %c0_i32 = arith.constant 0 : i32
    %c0_i32_0 = arith.constant 0 : i32
    %c0_i32_1 = arith.constant 0 : i32
    return %c0_i32, %c0_i32_0 : i32, i32
  }
  func.func @transform_2(%arg0: i32, %arg1: i32) -> (i32, i32) {
    %c0_i32 = arith.constant 0 : i32
    %c0_i32_0 = arith.constant 0 : i32
    %c0_i32_1 = arith.constant 0 : i32
    return %c0_i32, %c0_i32_0 : i32, i32
  }
  func.func @transform_3(%arg0: i32, %arg1: i32) -> (i32, i32) {
    %c0_i32 = arith.constant 0 : i32
    %c0_i32_0 = arith.constant 0 : i32
    %c0_i32_1 = arith.constant 0 : i32
    return %c0_i32, %c0_i32_0 : i32, i32
  }
  func.func @transform_4(%arg0: i32, %arg1: i32) -> (i32, i32) {
    %c0_i32 = arith.constant 0 : i32
    %c0_i32_0 = arith.constant 0 : i32
    %c0_i32_1 = arith.constant 0 : i32
    return %c0_i32, %c0_i32_0 : i32, i32
  }
  func.func @transform_5(%arg0: i32, %arg1: i32) -> (i32, i32) {
    %c0_i32 = arith.constant 0 : i32
    %c0_i32_0 = arith.constant 0 : i32
    return %arg0, %c0_i32 : i32, i32
  }
}

</mosaic_0001>

<llo_original>
// kernel: _lambda_.1
$region0: #{_lambda_.1}
  #allocation0 [shape = 'u32[]', space=smem, size = 0x4, offset = 0x4, fixed_abs, tag = 'smem constant byte address 0x4 - core index']
  #allocation1 [shape = 'u32[144,128]{1,0:T(1,128)}', space=vmem, size = 0x12000, scoped, tag = 'internal scratch']
  #allocation2 [shape = 'f32[8,128]{1,0:T(8,128)}', space=vmem, size = 0x1000, scoped, tag = 'scratch operand']
  #allocation3 [shape = 'f32[1,1]{1,0:T(1,128)S(6)}', space=smem, size = 0x200, scoped, tag = 'scoped memory for _lambda_.1']
  %s0 = inlined_call_operand.vmem [shape: f32[8,1024], index: 0, kind: input, shape index: {}]
  %s1 = inlined_call_operand.hbm [shape: bf16[1024,128], index: 1, kind: input, shape index: {}]
  %s2 = inlined_call_operand.vmem [shape: f32[1,128], index: 2, kind: input, shape index: {}]
  %s3 = inlined_call_operand.vmem [shape: f32[1,128], index: 3, kind: input, shape index: {}]
  %s4 = inlined_call_operand.<no memory space> [shape: f32[1,1], index: 4, kind: input, shape index: {}]
  %s5 = inlined_call_operand.vmem [shape: f32[8,1], index: 5, kind: output, shape index: {}]
  %s6 = sld [smem:[#allocation0]]
  $region42: #{_lambda_.1} parent=0
    _
  %s8 = ssub.s32 1, %s6
  %s9 = scalar_select 0, %s8, %s6
  %10 = sst [smem:[#allocation3]] %s4
  $region1: #{_lambda_.1} parent=0
    #allocation4 [shape = 'u8[262144]{0}', space=vmem, size = 0x40000, scoped, tag = 'input window, operand 1, single buffered']
    #allocation5 [shape = 's32[1]{0}', space=sflag, size = 0x4, scoped, tag = 'scoped memory for _lambda_.1']
    %11 = vsyncpa [#allocation5], 0
    // Predicated region
    $region2: #{_lambda_.1} parent=1 // pred_check
      _
    $region3: #{_lambda_.1} parent=1 // pred_check_branch
      %13 = sbr.rel (0) target = $region5
    $region4: #{_lambda_.1} parent=1 // pred_region
      _
    $region5: #{_lambda_.1} parent=1 // pred_fallthru
      _
    // Predicated region
    $region6: #{_lambda_.1} parent=1 // pred_check
      _
    $region7: #{_lambda_.1} parent=1 // pred_check_branch
      %15 = sbr.rel (0) target = $region9
    $region8: #{_lambda_.1} parent=1 // pred_region
      %s17 = ssub.s32 8192, 8192
      %18 = vsyncadd [#allocation5], %s17
      %s19 = sshll.u32 [#allocation4], 4
      %s20 = int_to_ptr.vmem [resolvable:$true] %s19
      %25 = dma.hbm_to_vmem [thread:$0]  %s1, 8192, %s20, [#allocation5], 64, 64, 4
    $region9: #{_lambda_.1} parent=1 // pred_fallthru
      _
    // Predicated region
    $region10: #{_lambda_.1} parent=1 // pred_check
      _
    $region11: #{_lambda_.1} parent=1 // pred_check_branch
      %27 = sbr.rel (0) target = $region13
    $region12: #{_lambda_.1} parent=1 // pred_region
      _
    $region13: #{_lambda_.1} parent=1 // pred_fallthru
      _
    // Predicated region
    $region14: #{_lambda_.1} parent=1 // pred_check
      _
    $region15: #{_lambda_.1} parent=1 // pred_check_branch
      %29 = sbr.rel (0) target = $region17
    $region16: #{_lambda_.1} parent=1 // pred_region
      _
    $region17: #{_lambda_.1} parent=1 // pred_fallthru
      _
    // Predicated region
    $region18: #{_lambda_.1} parent=1 // pred_check
      _
    $region19: #{_lambda_.1} parent=1 // pred_check_branch
      %31 = sbr.rel (0) target = $region21
    $region20: #{_lambda_.1} parent=1 // pred_region
      _
    $region21: #{_lambda_.1} parent=1 // pred_fallthru
      _
    // Predicated region
    $region22: #{_lambda_.1} parent=1 // pred_check
      _
    $region23: #{_lambda_.1} parent=1 // pred_check_branch
      %33 = sbr.rel (0) target = $region25
    $region24: #{_lambda_.1} parent=1 // pred_region
      %34 = dma.done [#allocation5], 8192
    $region25: #{_lambda_.1} parent=1 // pred_fallthru
      _
    %p36 = scmp.eq.s32.totalorder 0, 0
    // Predicated region
    $region26: #{_lambda_.1} parent=1 // pred_check
      %p37 = pneg %p36
    $region27: #{_lambda_.1} parent=1 // pred_check_branch
      %39 = sbr.rel (%p37) target = $region29
    $region28: #{_lambda_.1} parent=1 // pred_region
      %40 = vst [vmem:[#allocation2] sm:$0xff] 0.0
    $region29: #{_lambda_.1} parent=1 // pred_fallthru
      _
    %v41 = vld [vmem:[%s0] sm:$0xff]
    %v42 = vld [vmem:[%s0 + $0x8] sm:$0xff]
    %v43 = vld [vmem:[%s0 + $0x10] sm:$0xff]
    %v44 = vld [vmem:[%s0 + $0x18] sm:$0xff]
    %v45 = vld [vmem:[%s0 + $0x20] sm:$0xff]
    %v46 = vld [vmem:[%s0 + $0x28] sm:$0xff]
    %v47 = vld [vmem:[%s0 + $0x30] sm:$0xff]
    %v48 = vld [vmem:[%s0 + $0x38] sm:$0xff]
    %v49 = vpack.c.bf16 %v41, %v41
    %v50 = vpack.c.bf16 %v42, %v42
    %v51 = vpack.c.bf16 %v43, %v43
    %v52 = vpack.c.bf16 %v44, %v44
    %v53 = vpack.c.bf16 %v45, %v45
    %v54 = vpack.c.bf16 %v46, %v46
    %v55 = vpack.c.bf16 %v47, %v47
    %v56 = vpack.c.bf16 %v48, %v48
    %s57 = smul.u32 0, 1024
    %s58 = sshra.s32 %s57, 3
    %s59 = sand.u32 %s57, 7
    %s60 = smul.addr %s58, 4
    %s61 = scalar_lea.vmem [#allocation4], %s60
    %v62 = vld [vmem:[%s61] sm:$0xf]
    %v63 = vld [vmem:[%s61 + $0x4] sm:$0xf]
    %v64 = vld [vmem:[%s61 + $0x8] sm:$0xf]
    %v65 = vld [vmem:[%s61 + $0xc] sm:$0xf]
    %v66 = vld [vmem:[%s61 + $0x10] sm:$0xf]
    %v67 = vld [vmem:[%s61 + $0x14] sm:$0xf]
    %v68 = vld [vmem:[%s61 + $0x18] sm:$0xf]
    %v69 = vld [vmem:[%s61 + $0x1c] sm:$0xf]
    %v70 = vld [vmem:[%s61 + $0x20] sm:$0xf]
    %v71 = vld [vmem:[%s61 + $0x24] sm:$0xf]
    %v72 = vld [vmem:[%s61 + $0x28] sm:$0xf]
    %v73 = vld [vmem:[%s61 + $0x2c] sm:$0xf]
    %v74 = vld [vmem:[%s61 + $0x30] sm:$0xf]
    %v75 = vld [vmem:[%s61 + $0x34] sm:$0xf]
    %v76 = vld [vmem:[%s61 + $0x38] sm:$0xf]
    %v77 = vld [vmem:[%s61 + $0x3c] sm:$0xf]
    %v78 = vld [vmem:[%s61 + $0x40] sm:$0xf]
    %v79 = vld [vmem:[%s61 + $0x44] sm:$0xf]
    %v80 = vld [vmem:[%s61 + $0x48] sm:$0xf]
    %v81 = vld [vmem:[%s61 + $0x4c] sm:$0xf]
    %v82 = vld [vmem:[%s61 + $0x50] sm:$0xf]
    %v83 = vld [vmem:[%s61 + $0x54] sm:$0xf]
    %v84 = vld [vmem:[%s61 + $0x58] sm:$0xf]
    %v85 = vld [vmem:[%s61 + $0x5c] sm:$0xf]
    %v86 = vld [vmem:[%s61 + $0x60] sm:$0xf]
    %v87 = vld [vmem:[%s61 + $0x64] sm:$0xf]
    %v88 = vld [vmem:[%s61 + $0x68] sm:$0xf]
    %v89 = vld [vmem:[%s61 + $0x6c] sm:$0xf]
    %v90 = vld [vmem:[%s61 + $0x70] sm:$0xf]
    %v91 = vld [vmem:[%s61 + $0x74] sm:$0xf]
    %v92 = vld [vmem:[%s61 + $0x78] sm:$0xf]
    %v93 = vld [vmem:[%s61 + $0x7c] sm:$0xf]
    %v94 = vld [vmem:[%s61 + $0x80] sm:$0xf]
    %v95 = vld [vmem:[%s61 + $0x84] sm:$0xf]
    %v96 = vld [vmem:[%s61 + $0x88] sm:$0xf]
    %v97 = vld [vmem:[%s61 + $0x8c] sm:$0xf]
    %v98 = vld [vmem:[%s61 + $0x90] sm:$0xf]
    %v99 = vld [vmem:[%s61 + $0x94] sm:$0xf]
    %v100 = vld [vmem:[%s61 + $0x98] sm:$0xf]
    %v101 = vld [vmem:[%s61 + $0x9c] sm:$0xf]
    %v102 = vld [vmem:[%s61 + $0xa0] sm:$0xf]
    %v103 = vld [vmem:[%s61 + $0xa4] sm:$0xf]
    %v104 = vld [vmem:[%s61 + $0xa8] sm:$0xf]
    %v105 = vld [vmem:[%s61 + $0xac] sm:$0xf]
    %v106 = vld [vmem:[%s61 + $0xb0] sm:$0xf]
    %v107 = vld [vmem:[%s61 + $0xb4] sm:$0xf]
    %v108 = vld [vmem:[%s61 + $0xb8] sm:$0xf]
    %v109 = vld [vmem:[%s61 + $0xbc] sm:$0xf]
    %v110 = vld [vmem:[%s61 + $0xc0] sm:$0xf]
    %v111 = vld [vmem:[%s61 + $0xc4] sm:$0xf]
    %v112 = vld [vmem:[%s61 + $0xc8] sm:$0xf]
    %v113 = vld [vmem:[%s61 + $0xcc] sm:$0xf]
    %v114 = vld [vmem:[%s61 + $0xd0] sm:$0xf]
    %v115 = vld [vmem:[%s61 + $0xd4] sm:$0xf]
    %v116 = vld [vmem:[%s61 + $0xd8] sm:$0xf]
    %v117 = vld [vmem:[%s61 + $0xdc] sm:$0xf]
    %v118 = vld [vmem:[%s61 + $0xe0] sm:$0xf]
    %v119 = vld [vmem:[%s61 + $0xe4] sm:$0xf]
    %v120 = vld [vmem:[%s61 + $0xe8] sm:$0xf]
    %v121 = vld [vmem:[%s61 + $0xec] sm:$0xf]
    %v122 = vld [vmem:[%s61 + $0xf0] sm:$0xf]
    %v123 = vld [vmem:[%s61 + $0xf4] sm:$0xf]
    %v124 = vld [vmem:[%s61 + $0xf8] sm:$0xf]
    %v125 = vld [vmem:[%s61 + $0xfc] sm:$0xf]
    %v126 = vld [vmem:[%s61 + $0x100] sm:$0xf]
    %v127 = vld [vmem:[%s61 + $0x104] sm:$0xf]
    %v128 = vld [vmem:[%s61 + $0x108] sm:$0xf]
    %v129 = vld [vmem:[%s61 + $0x10c] sm:$0xf]
    %v130 = vld [vmem:[%s61 + $0x110] sm:$0xf]
    %v131 = vld [vmem:[%s61 + $0x114] sm:$0xf]
    %v132 = vld [vmem:[%s61 + $0x118] sm:$0xf]
    %v133 = vld [vmem:[%s61 + $0x11c] sm:$0xf]
    %v134 = vld [vmem:[%s61 + $0x120] sm:$0xf]
    %v135 = vld [vmem:[%s61 + $0x124] sm:$0xf]
    %v136 = vld [vmem:[%s61 + $0x128] sm:$0xf]
    %v137 = vld [vmem:[%s61 + $0x12c] sm:$0xf]
    %v138 = vld [vmem:[%s61 + $0x130] sm:$0xf]
    %v139 = vld [vmem:[%s61 + $0x134] sm:$0xf]
    %v140 = vld [vmem:[%s61 + $0x138] sm:$0xf]
    %v141 = vld [vmem:[%s61 + $0x13c] sm:$0xf]
    %v142 = vld [vmem:[%s61 + $0x140] sm:$0xf]
    %v143 = vld [vmem:[%s61 + $0x144] sm:$0xf]
    %v144 = vld [vmem:[%s61 + $0x148] sm:$0xf]
    %v145 = vld [vmem:[%s61 + $0x14c] sm:$0xf]
    %v146 = vld [vmem:[%s61 + $0x150] sm:$0xf]
    %v147 = vld [vmem:[%s61 + $0x154] sm:$0xf]
    %v148 = vld [vmem:[%s61 + $0x158] sm:$0xf]
    %v149 = vld [vmem:[%s61 + $0x15c] sm:$0xf]
    %v150 = vld [vmem:[%s61 + $0x160] sm:$0xf]
    %v151 = vld [vmem:[%s61 + $0x164] sm:$0xf]
    %v152 = vld [vmem:[%s61 + $0x168] sm:$0xf]
    %v153 = vld [vmem:[%s61 + $0x16c] sm:$0xf]
    %v154 = vld [vmem:[%s61 + $0x170] sm:$0xf]
    %v155 = vld [vmem:[%s61 + $0x174] sm:$0xf]
    %v156 = vld [vmem:[%s61 + $0x178] sm:$0xf]
    %v157 = vld [vmem:[%s61 + $0x17c] sm:$0xf]
    %v158 = vld [vmem:[%s61 + $0x180] sm:$0xf]
    %v159 = vld [vmem:[%s61 + $0x184] sm:$0xf]
    %v160 = vld [vmem:[%s61 + $0x188] sm:$0xf]
    %v161 = vld [vmem:[%s61 + $0x18c] sm:$0xf]
    %v162 = vld [vmem:[%s61 + $0x190] sm:$0xf]
    %v163 = vld [vmem:[%s61 + $0x194] sm:$0xf]
    %v164 = vld [vmem:[%s61 + $0x198] sm:$0xf]
    %v165 = vld [vmem:[%s61 + $0x19c] sm:$0xf]
    %v166 = vld [vmem:[%s61 + $0x1a0] sm:$0xf]
    %v167 = vld [vmem:[%s61 + $0x1a4] sm:$0xf]
    %v168 = vld [vmem:[%s61 + $0x1a8] sm:$0xf]
    %v169 = vld [vmem:[%s61 + $0x1ac] sm:$0xf]
    %v170 = vld [vmem:[%s61 + $0x1b0] sm:$0xf]
    %v171 = vld [vmem:[%s61 + $0x1b4] sm:$0xf]
    %v172 = vld [vmem:[%s61 + $0x1b8] sm:$0xf]
    %v173 = vld [vmem:[%s61 + $0x1bc] sm:$0xf]
    %v174 = vld [vmem:[%s61 + $0x1c0] sm:$0xf]
    %v175 = vld [vmem:[%s61 + $0x1c4] sm:$0xf]
    %v176 = vld [vmem:[%s61 + $0x1c8] sm:$0xf]
    %v177 = vld [vmem:[%s61 + $0x1cc] sm:$0xf]
    %v178 = vld [vmem:[%s61 + $0x1d0] sm:$0xf]
    %v179 = vld [vmem:[%s61 + $0x1d4] sm:$0xf]
    %v180 = vld [vmem:[%s61 + $0x1d8] sm:$0xf]
    %v181 = vld [vmem:[%s61 + $0x1dc] sm:$0xf]
    %v182 = vld [vmem:[%s61 + $0x1e0] sm:$0xf]
    %v183 = vld [vmem:[%s61 + $0x1e4] sm:$0xf]
    %v184 = vld [vmem:[%s61 + $0x1e8] sm:$0xf]
    %v185 = vld [vmem:[%s61 + $0x1ec] sm:$0xf]
    %v186 = vld [vmem:[%s61 + $0x1f0] sm:$0xf]
    %v187 = vld [vmem:[%s61 + $0x1f4] sm:$0xf]
    %v188 = vld [vmem:[%s61 + $0x1f8] sm:$0xf]
    %v189 = vld [vmem:[%s61 + $0x1fc] sm:$0xf]
    %v190 = vld [vmem:[#allocation2] sm:$0xff]
    %v319 = vunpack.c.l.b16 %v62
    %v320 = vunpack.c.l.b16 %v63
    %v321 = vunpack.c.l.b16 %v64
    %v322 = vunpack.c.l.b16 %v65
    %v323 = vunpack.c.l.b16 %v66
    %v324 = vunpack.c.l.b16 %v67
    %v325 = vunpack.c.l.b16 %v68
    %v326 = vunpack.c.l.b16 %v69
    %v327 = vunpack.c.l.b16 %v70
    %v328 = vunpack.c.l.b16 %v71
    %v329 = vunpack.c.l.b16 %v72
    %v330 = vunpack.c.l.b16 %v73
    %v331 = vunpack.c.l.b16 %v74
    %v332 = vunpack.c.l.b16 %v75
    %v333 = vunpack.c.l.b16 %v76
    %v334 = vunpack.c.l.b16 %v77
    %v335 = vunpack.c.l.b16 %v78
    %v336 = vunpack.c.l.b16 %v79
    %v337 = vunpack.c.l.b16 %v80
    %v338 = vunpack.c.l.b16 %v81
    %v339 = vunpack.c.l.b16 %v82
    %v340 = vunpack.c.l.b16 %v83
    %v341 = vunpack.c.l.b16 %v84
    %v342 = vunpack.c.l.b16 %v85
    %v343 = vunpack.c.l.b16 %v86
    %v344 = vunpack.c.l.b16 %v87
    %v345 = vunpack.c.l.b16 %v88
    %v346 = vunpack.c.l.b16 %v89
    %v347 = vunpack.c.l.b16 %v90
    %v348 = vunpack.c.l.b16 %v91
    %v349 = vunpack.c.l.b16 %v92
    %v350 = vunpack.c.l.b16 %v93
    %v351 = vunpack.c.l.b16 %v94
    %v352 = vunpack.c.l.b16 %v95
    %v353 = vunpack.c.l.b16 %v96
    %v354 = vunpack.c.l.b16 %v97
    %v355 = vunpack.c.l.b16 %v98
    %v356 = vunpack.c.l.b16 %v99
    %v357 = vunpack.c.l.b16 %v100
    %v358 = vunpack.c.l.b16 %v101
    %v359 = vunpack.c.l.b16 %v102
    %v360 = vunpack.c.l.b16 %v103
    %v361 = vunpack.c.l.b16 %v104
    %v362 = vunpack.c.l.b16 %v105
    %v363 = vunpack.c.l.b16 %v106
    %v364 = vunpack.c.l.b16 %v107
    %v365 = vunpack.c.l.b16 %v108
    %v366 = vunpack.c.l.b16 %v109
    %v367 = vunpack.c.l.b16 %v110
    %v368 = vunpack.c.l.b16 %v111
    %v369 = vunpack.c.l.b16 %v112
    %v370 = vunpack.c.l.b16 %v113
    %v371 = vunpack.c.l.b16 %v114
    %v372 = vunpack.c.l.b16 %v115
    %v373 = vunpack.c.l.b16 %v116
    %v374 = vunpack.c.l.b16 %v117
    %v375 = vunpack.c.l.b16 %v118
    %v376 = vunpack.c.l.b16 %v119
    %v377 = vunpack.c.l.b16 %v120
    %v378 = vunpack.c.l.b16 %v121
    %v379 = vunpack.c.l.b16 %v122
    %v380 = vunpack.c.l.b16 %v123
    %v381 = vunpack.c.l.b16 %v124
    %v382 = vunpack.c.l.b16 %v125
    %v383 = vunpack.c.l.b16 %v126
    %v384 = vunpack.c.l.b16 %v127
    %v385 = vunpack.c.l.b16 %v128
    %v386 = vunpack.c.l.b16 %v129
    %v387 = vunpack.c.l.b16 %v130
    %v388 = vunpack.c.l.b16 %v131
    %v389 = vunpack.c.l.b16 %v132
    %v390 = vunpack.c.l.b16 %v133
    %v391 = vunpack.c.l.b16 %v134
    %v392 = vunpack.c.l.b16 %v135
    %v393 = vunpack.c.l.b16 %v136
    %v394 = vunpack.c.l.b16 %v137
    %v395 = vunpack.c.l.b16 %v138
    %v396 = vunpack.c.l.b16 %v139
    %v397 = vunpack.c.l.b16 %v140
    %v398 = vunpack.c.l.b16 %v141
    %v399 = vunpack.c.l.b16 %v142
    %v400 = vunpack.c.l.b16 %v143
    %v401 = vunpack.c.l.b16 %v144
    %v402 = vunpack.c.l.b16 %v145
    %v403 = vunpack.c.l.b16 %v146
    %v404 = vunpack.c.l.b16 %v147
    %v405 = vunpack.c.l.b16 %v148
    %v406 = vunpack.c.l.b16 %v149
    %v407 = vunpack.c.l.b16 %v150
    %v408 = vunpack.c.l.b16 %v151
    %v409 = vunpack.c.l.b16 %v152
    %v410 = vunpack.c.l.b16 %v153
    %v411 = vunpack.c.l.b16 %v154
    %v412 = vunpack.c.l.b16 %v155
    %v413 = vunpack.c.l.b16 %v156
    %v414 = vunpack.c.l.b16 %v157
    %v415 = vunpack.c.l.b16 %v158
    %v416 = vunpack.c.l.b16 %v159
    %v417 = vunpack.c.l.b16 %v160
    %v418 = vunpack.c.l.b16 %v161
    %v419 = vunpack.c.l.b16 %v162
    %v420 = vunpack.c.l.b16 %v163
    %v421 = vunpack.c.l.b16 %v164
    %v422 = vunpack.c.l.b16 %v165
    %v423 = vunpack.c.l.b16 %v166
    %v424 = vunpack.c.l.b16 %v167
    %v425 = vunpack.c.l.b16 %v168
    %v426 = vunpack.c.l.b16 %v169
    %v427 = vunpack.c.l.b16 %v170
    %v428 = vunpack.c.l.b16 %v171
    %v429 = vunpack.c.l.b16 %v172
    %v430 = vunpack.c.l.b16 %v173
    %v431 = vunpack.c.l.b16 %v174
    %v432 = vunpack.c.l.b16 %v175
    %v433 = vunpack.c.l.b16 %v176
    %v434 = vunpack.c.l.b16 %v177
    %v435 = vunpack.c.l.b16 %v178
    %v436 = vunpack.c.l.b16 %v179
    %v437 = vunpack.c.l.b16 %v180
    %v438 = vunpack.c.l.b16 %v181
    %v439 = vunpack.c.l.b16 %v182
    %v440 = vunpack.c.l.b16 %v183
    %v441 = vunpack.c.l.b16 %v184
    %v442 = vunpack.c.l.b16 %v185
    %v443 = vunpack.c.l.b16 %v186
    %v444 = vunpack.c.l.b16 %v187
    %v445 = vunpack.c.l.b16 %v188
    %v446 = vunpack.c.l.b16 %v189
    %v447 = vpack.c.b16 %v320, %v319
    %v448 = vpack.c.b16 %v322, %v321
    %v449 = vpack.c.b16 %v324, %v323
    %v450 = vpack.c.b16 %v326, %v325
    %v451 = vpack.c.b16 %v328, %v327
    %v452 = vpack.c.b16 %v330, %v329
    %v453 = vpack.c.b16 %v332, %v331
    %v454 = vpack.c.b16 %v334, %v333
    %v455 = vpack.c.b16 %v336, %v335
    %v456 = vpack.c.b16 %v338, %v337
    %v457 = vpack.c.b16 %v340, %v339
    %v458 = vpack.c.b16 %v342, %v341
    %v459 = vpack.c.b16 %v344, %v343
    %v460 = vpack.c.b16 %v346, %v345
    %v461 = vpack.c.b16 %v348, %v347
    %v462 = vpack.c.b16 %v350, %v349
    %v463 = vpack.c.b16 %v352, %v351
    %v464 = vpack.c.b16 %v354, %v353
    %v465 = vpack.c.b16 %v356, %v355
    %v466 = vpack.c.b16 %v358, %v357
    %v467 = vpack.c.b16 %v360, %v359
    %v468 = vpack.c.b16 %v362, %v361
    %v469 = vpack.c.b16 %v364, %v363
    %v470 = vpack.c.b16 %v366, %v365
    %v471 = vpack.c.b16 %v368, %v367
    %v472 = vpack.c.b16 %v370, %v369
    %v473 = vpack.c.b16 %v372, %v371
    %v474 = vpack.c.b16 %v374, %v373
    %v475 = vpack.c.b16 %v376, %v375
    %v476 = vpack.c.b16 %v378, %v377
    %v477 = vpack.c.b16 %v380, %v379
    %v478 = vpack.c.b16 %v382, %v381
    %v479 = vpack.c.b16 %v384, %v383
    %v480 = vpack.c.b16 %v386, %v385
    %v481 = vpack.c.b16 %v388, %v387
    %v482 = vpack.c.b16 %v390, %v389
    %v483 = vpack.c.b16 %v392, %v391
    %v484 = vpack.c.b16 %v394, %v393
    %v485 = vpack.c.b16 %v396, %v395
    %v486 = vpack.c.b16 %v398, %v397
    %v487 = vpack.c.b16 %v400, %v399
    %v488 = vpack.c.b16 %v402, %v401
    %v489 = vpack.c.b16 %v404, %v403
    %v490 = vpack.c.b16 %v406, %v405
    %v491 = vpack.c.b16 %v408, %v407
    %v492 = vpack.c.b16 %v410, %v409
    %v493 = vpack.c.b16 %v412, %v411
    %v494 = vpack.c.b16 %v414, %v413
    %v495 = vpack.c.b16 %v416, %v415
    %v496 = vpack.c.b16 %v418, %v417
    %v497 = vpack.c.b16 %v420, %v419
    %v498 = vpack.c.b16 %v422, %v421
    %v499 = vpack.c.b16 %v424, %v423
    %v500 = vpack.c.b16 %v426, %v425
    %v501 = vpack.c.b16 %v428, %v427
    %v502 = vpack.c.b16 %v430, %v429
    %v503 = vpack.c.b16 %v432, %v431
    %v504 = vpack.c.b16 %v434, %v433
    %v505 = vpack.c.b16 %v436, %v435
    %v506 = vpack.c.b16 %v438, %v437
    %v507 = vpack.c.b16 %v440, %v439
    %v508 = vpack.c.b16 %v442, %v441
    %v509 = vpack.c.b16 %v444, %v443
    %v510 = vpack.c.b16 %v446, %v445
    %575 = vmatprep.subr.bf16.mxu0 0
    %576 = vmatpush1.bf16.msra.mxu0 %v447
    %577 = vmatprep.subr.bf16.mxu0 0
    %578 = vmatpush1.bf16.msra.mxu0 %v448
    %579 = vmatprep.subr.bf16.mxu0 0
    %580 = vmatpush1.bf16.msra.mxu0 %v449
    %581 = vmatprep.subr.bf16.mxu0 0
    %582 = vmatpush1.bf16.msra.mxu0 %v450
    %583 = vmatprep.subr.bf16.mxu0 0
    %584 = vmatpush1.bf16.msra.mxu0 %v451
    %585 = vmatprep.subr.bf16.mxu0 0
    %586 = vmatpush1.bf16.msra.mxu0 %v452
    %587 = vmatprep.subr.bf16.mxu0 0
    %588 = vmatpush1.bf16.msra.mxu0 %v453
    %589 = vmatprep.subr.bf16.mxu0 0
    %590 = vmatpush1.bf16.msra.mxu0 %v454
    %591 = vmatprep.subr.bf16.mxu0 0
    %592 = vmatpush1.bf16.msra.mxu0 %v455
    %593 = vmatprep.subr.bf16.mxu0 0
    %594 = vmatpush1.bf16.msra.mxu0 %v456
    %595 = vmatprep.subr.bf16.mxu0 0
    %596 = vmatpush1.bf16.msra.mxu0 %v457
    %597 = vmatprep.subr.bf16.mxu0 0
    %598 = vmatpush1.bf16.msra.mxu0 %v458
    %599 = vmatprep.subr.bf16.mxu0 0
    %600 = vmatpush1.bf16.msra.mxu0 %v459
    %601 = vmatprep.subr.bf16.mxu0 0
    %602 = vmatpush1.bf16.msra.mxu0 %v460
    %603 = vmatprep.subr.bf16.mxu0 0
    %604 = vmatpush1.bf16.msra.mxu0 %v461
    %605 = vmatprep.subr.bf16.mxu0 0
    %606 = vmatpush1.bf16.msra.mxu0 %v462
    %607 = vmatprep.mubr.bf16.mxu0 %v50
    %608 = vmatmul.mubr.bf16.gmra.mrb[0].mxu0 %v49
    %v609 = vpop.f32.mrb[0].mxu0
    %v610 = vadd.f32 0.0, %v609
    %v611 = vpop.f32.mrb[0].mxu0
    %v612 = vpop.f32.mrb[0].mxu0
    %v613 = vpop.f32.mrb[0].mxu0
    %614 = vdwg.mxu0
    %615 = vmatprep.subr.bf16.mxu0 0
    %616 = vmatpush1.bf16.msra.mxu0 %v463
    %617 = vmatprep.subr.bf16.mxu0 0
    %618 = vmatpush1.bf16.msra.mxu0 %v464
    %619 = vmatprep.subr.bf16.mxu0 0
    %620 = vmatpush1.bf16.msra.mxu0 %v465
    %621 = vmatprep.subr.bf16.mxu0 0
    %622 = vmatpush1.bf16.msra.mxu0 %v466
    %623 = vmatprep.subr.bf16.mxu0 0
    %624 = vmatpush1.bf16.msra.mxu0 %v467
    %625 = vmatprep.subr.bf16.mxu0 0
    %626 = vmatpush1.bf16.msra.mxu0 %v468
    %627 = vmatprep.subr.bf16.mxu0 0
    %628 = vmatpush1.bf16.msra.mxu0 %v469
    %629 = vmatprep.subr.bf16.mxu0 0
    %630 = vmatpush1.bf16.msra.mxu0 %v470
    %631 = vmatprep.subr.bf16.mxu0 0
    %632 = vmatpush1.bf16.msra.mxu0 %v471
    %633 = vmatprep.subr.bf16.mxu0 0
    %634 = vmatpush1.bf16.msra.mxu0 %v472
    %635 = vmatprep.subr.bf16.mxu0 0
    %636 = vmatpush1.bf16.msra.mxu0 %v473
    %637 = vmatprep.subr.bf16.mxu0 0
    %638 = vmatpush1.bf16.msra.mxu0 %v474
    %639 = vmatprep.subr.bf16.mxu0 0
    %640 = vmatpush1.bf16.msra.mxu0 %v475
    %641 = vmatprep.subr.bf16.mxu0 0
    %642 = vmatpush1.bf16.msra.mxu0 %v476
    %643 = vmatprep.subr.bf16.mxu0 0
    %644 = vmatpush1.bf16.msra.mxu0 %v477
    %645 = vmatprep.subr.bf16.mxu0 0
    %646 = vmatpush1.bf16.msra.mxu0 %v478
    %647 = vmatprep.mubr.bf16.mxu0 %v52
    %648 = vmatmul.mubr.bf16.gmra.mrb[0].mxu0 %v51
    %v649 = vpop.f32.mrb[0].mxu0
    %v650 = vadd.f32 %v610, %v649
    %v651 = vpop.f32.mrb[0].mxu0
    %v652 = vpop.f32.mrb[0].mxu0
    %v653 = vpop.f32.mrb[0].mxu0
    %654 = vdwg.mxu0
    %655 = vmatprep.subr.bf16.mxu0 0
    %656 = vmatpush1.bf16.msra.mxu0 %v479
    %657 = vmatprep.subr.bf16.mxu0 0
    %658 = vmatpush1.bf16.msra.mxu0 %v480
    %659 = vmatprep.subr.bf16.mxu0 0
    %660 = vmatpush1.bf16.msra.mxu0 %v481
    %661 = vmatprep.subr.bf16.mxu0 0
    %662 = vmatpush1.bf16.msra.mxu0 %v482
    %663 = vmatprep.subr.bf16.mxu0 0
    %664 = vmatpush1.bf16.msra.mxu0 %v483
    %665 = vmatprep.subr.bf16.mxu0 0
    %666 = vmatpush1.bf16.msra.mxu0 %v484
    %667 = vmatprep.subr.bf16.mxu0 0
    %668 = vmatpush1.bf16.msra.mxu0 %v485
    %669 = vmatprep.subr.bf16.mxu0 0
    %670 = vmatpush1.bf16.msra.mxu0 %v486
    %671 = vmatprep.subr.bf16.mxu0 0
    %672 = vmatpush1.bf16.msra.mxu0 %v487
    %673 = vmatprep.subr.bf16.mxu0 0
    %674 = vmatpush1.bf16.msra.mxu0 %v488
    %675 = vmatprep.subr.bf16.mxu0 0
    %676 = vmatpush1.bf16.msra.mxu0 %v489
    %677 = vmatprep.subr.bf16.mxu0 0
    %678 = vmatpush1.bf16.msra.mxu0 %v490
    %679 = vmatprep.subr.bf16.mxu0 0
    %680 = vmatpush1.bf16.msra.mxu0 %v491
    %681 = vmatprep.subr.bf16.mxu0 0
    %682 = vmatpush1.bf16.msra.mxu0 %v492
    %683 = vmatprep.subr.bf16.mxu0 0
    %684 = vmatpush1.bf16.msra.mxu0 %v493
    %685 = vmatprep.subr.bf16.mxu0 0
    %686 = vmatpush1.bf16.msra.mxu0 %v494
    %687 = vmatprep.mubr.bf16.mxu0 %v54
    %688 = vmatmul.mubr.bf16.gmra.mrb[0].mxu0 %v53
    %v689 = vpop.f32.mrb[0].mxu0
    %v690 = vadd.f32 %v650, %v689
    %v691 = vpop.f32.mrb[0].mxu0
    %v692 = vpop.f32.mrb[0].mxu0
    %v693 = vpop.f32.mrb[0].mxu0
    %694 = vdwg.mxu0
    %695 = vmatprep.subr.bf16.mxu0 0
    %696 = vmatpush1.bf16.msra.mxu0 %v495
    %697 = vmatprep.subr.bf16.mxu0 0
    %698 = vmatpush1.bf16.msra.mxu0 %v496
    %699 = vmatprep.subr.bf16.mxu0 0
    %700 = vmatpush1.bf16.msra.mxu0 %v497
    %701 = vmatprep.subr.bf16.mxu0 0
    %702 = vmatpush1.bf16.msra.mxu0 %v498
    %703 = vmatprep.subr.bf16.mxu0 0
    %704 = vmatpush1.bf16.msra.mxu0 %v499
    %705 = vmatprep.subr.bf16.mxu0 0
    %706 = vmatpush1.bf16.msra.mxu0 %v500
    %707 = vmatprep.subr.bf16.mxu0 0
    %708 = vmatpush1.bf16.msra.mxu0 %v501
    %709 = vmatprep.subr.bf16.mxu0 0
    %710 = vmatpush1.bf16.msra.mxu0 %v502
    %711 = vmatprep.subr.bf16.mxu0 0
    %712 = vmatpush1.bf16.msra.mxu0 %v503
    %713 = vmatprep.subr.bf16.mxu0 0
    %714 = vmatpush1.bf16.msra.mxu0 %v504
    %715 = vmatprep.subr.bf16.mxu0 0
    %716 = vmatpush1.bf16.msra.mxu0 %v505
    %717 = vmatprep.subr.bf16.mxu0 0
    %718 = vmatpush1.bf16.msra.mxu0 %v506
    %719 = vmatprep.subr.bf16.mxu0 0
    %720 = vmatpush1.bf16.msra.mxu0 %v507
    %721 = vmatprep.subr.bf16.mxu0 0
    %722 = vmatpush1.bf16.msra.mxu0 %v508
    %723 = vmatprep.subr.bf16.mxu0 0
    %724 = vmatpush1.bf16.msra.mxu0 %v509
    %725 = vmatprep.subr.bf16.mxu0 0
    %726 = vmatpush1.bf16.msra.mxu0 %v510
    %727 = vmatprep.mubr.bf16.mxu0 %v56
    %728 = vmatmul.mubr.bf16.gmra.mrb[0].mxu0 %v55
    %v729 = vpop.f32.mrb[0].mxu0
    %v730 = vadd.f32 %v690, %v729
    %v731 = vpop.f32.mrb[0].mxu0
    %v732 = vpop.f32.mrb[0].mxu0
    %v733 = vpop.f32.mrb[0].mxu0
    %734 = vdwg.mxu0
    %v735 = vadd.f32 %v190, %v730
    %736 = vst [vmem:[#allocation2] sm:$0xff] %v735
    // Predicated region
    $region30: #{_lambda_.1} parent=1 // pred_check
      %p737 = pneg %p36
    $region31: #{_lambda_.1} parent=1 // pred_check_branch
      %739 = sbr.rel (%p737) target = $region33
    $region32: #{_lambda_.1} parent=1 // pred_region
      %v740 = vld [vmem:[#allocation2] sm:$0xff]
      %v741 = vld [vmem:[%s2] sm:$0x1]
      %v743 = vlaneseq
      %v744 = vshrl.u32 %v743, 7
      %v745 = vsub.s32 0, %v744
      %v746 = vrot.slane %v741, %v745
      %v748 = vadd.f32 %v740, %v746
      %v749 = vmax.f32 %v748, 0.0
      %v750 = vld [vmem:[%s3] sm:$0x1]
      %v752 = vlaneseq
      %v753 = vshrl.u32 %v752, 7
      %v754 = vsub.s32 0, %v753
      %v755 = vrot.slane %v750, %v754
      %v757 = vmul.f32 %v749, %v755
      %758 = vadd.xlane.f32.xlu0 %v757
      %v759 = vpop.xlane.xlu0 %758
      %s760 = sld [smem:[#allocation3]]
      %v761 = vstv %s760
      %v762 = vadd.f32 %v759, %v761
      %vm763 = vcmask 7168
      %764 = vst.msk [vmem:[%s5] sm:$0xff] %vm763, %v762
    $region33: #{_lambda_.1} parent=1 // pred_fallthru
      _
    // Predicated region
    $region34: #{_lambda_.1} parent=1 // pred_check
      _
    $region35: #{_lambda_.1} parent=1 // pred_check_branch
      %766 = sbr.rel (0) target = $region37
    $region36: #{_lambda_.1} parent=1 // pred_region
      _
    $region37: #{_lambda_.1} parent=1 // pred_fallthru
      _
    // Predicated region
    $region38: #{_lambda_.1} parent=1 // pred_check
      _
    $region39: #{_lambda_.1} parent=1 // pred_check_branch
      %768 = sbr.rel (0) target = $region41
    $region40: #{_lambda_.1} parent=1 // pred_region
      _
    $region41: #{_lambda_.1} parent=1 // pred_fallthru
      _
    %769 = vsyncpa [#allocation5], 1

</llo_original>
